<compile_context>
chip_gen: v5e
topology: v5e:2x2
jax: 0.10.0
libtpu: 0.0.40
codegen_flags: <defaults>
</compile_context>

<pallas_src>
import functools

import jax
import jax.numpy as jnp
from jax.experimental import pallas as pl
from jax.experimental.pallas import tpu as pltpu

PRIMITIVES = [
    'none', 'max_pool_3x3', 'avg_pool_3x3', 'skip_connect',
    'sep_conv_3x3', 'sep_conv_5x5', 'dil_conv_3x3', 'dil_conv_5x5',
]


# ----------------------------------------------------------------------------
# Pallas kernel: fused  (ReLU ->) matmul (-> BatchNorm) -> col_scale (+ bias)
# ----------------------------------------------------------------------------
def _fused_kernel(a_ref, b_ref, scale_ref, bias_ref, o_ref, *, relu_a, bn):
    a = a_ref[...]                                   # bf16 operand
    if relu_a:
        a = jnp.maximum(a, 0)
    # bf16 MXU operands, f32 accumulation (v6e/v7x native; fine on v5e too).
    acc = jnp.dot(a, b_ref[...], preferred_element_type=jnp.float32)
    if bn:
        # Training-mode BatchNorm2d over (N, H, W) == rows of the im2col matmul.
        mean = jnp.mean(acc, axis=0, keepdims=True)
        var = jnp.mean(jnp.square(acc - mean), axis=0, keepdims=True)
        acc = (acc - mean) * jax.lax.rsqrt(var + 1e-5)
    # Per-column scale folds the DARTS architecture weights; epilogue in f32.
    o_ref[...] = acc * scale_ref[...] + bias_ref[...]


@functools.partial(jax.jit, static_argnames=("relu_a", "bn"))
def fused_matmul(a, b, scale, bias, *, relu_a=False, bn=False):
    """(M,K) @ (K,N) with optional fused ReLU(A), BatchNorm and column scale."""
    a = a.astype(jnp.bfloat16)       # relu(cast(x)) == cast(relu(x)): exact
    b = b.astype(jnp.bfloat16)
    M, K = a.shape
    _, N = b.shape
    scale = scale.reshape(1, N).astype(jnp.float32)
    bias = bias.reshape(1, N).astype(jnp.float32)
    kernel = functools.partial(_fused_kernel, relu_a=relu_a, bn=bn)
    return pl.pallas_call(
        kernel,
        out_shape=jax.ShapeDtypeStruct((M, N), jnp.float32),
        grid=(1,),   # M<=512, K<=~800 here: whole problem fits VMEM in one step
        in_specs=[
            pl.BlockSpec((M, K), lambda i: (0, 0)),
            pl.BlockSpec((K, N), lambda i: (0, 0)),
            pl.BlockSpec((1, N), lambda i: (0, 0)),
            pl.BlockSpec((1, N), lambda i: (0, 0)),
        ],
        out_specs=pl.BlockSpec((M, N), lambda i: (0, 0)),
        compiler_params=pltpu.CompilerParams(
            dimension_semantics=("arbitrary",)),
    )(a, b, scale, bias)


def fused_slab(a_groups, b_blocks, col_scales, *, relu_a, bn):
    """Batch many small (relu->)conv(->BN)(*arch_weight) branches into ONE
    pallas_call.

    a_groups[i]:  (M, K_i)   im2col LHS of branch i (same M / row order for all)
    b_blocks[i]:  (K_i, N_i) dense weight of branch i
    col_scales[i]: scalar multiplier (arch weight) for branch i's output columns

    Builds A = concat_K(a_groups), B = block_diag(b_blocks).  BN per column is
    identical to per-branch BN, so fusing is exact.  Returns the per-branch
    (M, N_i) outputs.
    """
    A = jnp.concatenate(a_groups, axis=1)
    Ktot = sum(b.shape[0] for b in b_blocks)
    Ntot = sum(b.shape[1] for b in b_blocks)
    B = jnp.zeros((Ktot, Ntot), jnp.float32)
    scale_parts = []
    ko = no = 0
    for b, s in zip(b_blocks, col_scales):
        kb, nb = b.shape
        B = B.at[ko:ko + kb, no:no + nb].set(b.astype(jnp.float32))
        scale_parts.append(s * jnp.ones((nb,), jnp.float32))
        ko += kb
        no += nb
    scale = jnp.concatenate(scale_parts)
    bias = jnp.zeros((Ntot,), jnp.float32)
    out = fused_matmul(A, B, scale, bias, relu_a=relu_a, bn=bn)
    outs = []
    no = 0
    for b in b_blocks:
        nb = b.shape[1]
        outs.append(out[:, no:no + nb])
        no += nb
    return outs


# ----------------------------------------------------------------------------
# im2col / weight-folding helpers (JAX glue; all matmuls run in Pallas)
# ----------------------------------------------------------------------------
def im2col(x, KH, KW, stride, padding, dilation):
    """x: (N,H,W,C) -> (N*Ho*Wo, KH*KW*C) tap-major (kh,kw), channel minor."""
    N, H, W, C = x.shape
    xp = jnp.pad(x, ((0, 0), (padding, padding), (padding, padding), (0, 0)))
    Ho = (H + 2 * padding - dilation * (KH - 1) - 1) // stride + 1
    Wo = (W + 2 * padding - dilation * (KW - 1) - 1) // stride + 1
    cols = []
    for kh in range(KH):
        for kw in range(KW):
            cols.append(xp[:, kh * dilation: kh * dilation + stride * (Ho - 1) + 1: stride,
                            kw * dilation: kw * dilation + stride * (Wo - 1) + 1: stride, :])
    patches = jnp.concatenate(cols, axis=-1)
    return patches.reshape(N * Ho * Wo, KH * KW * C), Ho, Wo


def dw_pw_weight(dw, pw):
    """Fold depthwise (KH,KW,C) + pointwise (1,1,C,Cout) into one dense
    (KH*KW*C, Cout) matmul weight:  B[(tap,c), o] = dw[tap,c] * pw[c,o]."""
    KH, KW, C = dw.shape
    Cout = pw.shape[-1]
    wp = pw.reshape(C, Cout)
    return (dw.reshape(KH * KW, C, 1) * wp[None, :, :]).reshape(KH * KW * C, Cout)


# ----------------------------------------------------------------------------
# Small non-matmul pieces (pure JAX / VPU): pools, BN for pools, shuffle
# ----------------------------------------------------------------------------
def batchnorm(x, eps=1e-5):
    mean = jnp.mean(x, axis=(0, 1, 2), keepdims=True)
    var = jnp.mean((x - mean) ** 2, axis=(0, 1, 2), keepdims=True)
    return (x - mean) / jnp.sqrt(var + eps)


def max_pool(x, k, stride, padding):
    N, H, W, C = x.shape
    if padding > 0:
        xp = jnp.pad(x, ((0, 0), (padding, padding), (padding, padding), (0, 0)),
                     constant_values=-jnp.inf)
    else:
        xp = x
    Ho = (H + 2 * padding - k) // stride + 1
    Wo = (W + 2 * padding - k) // stride + 1
    taps = []
    for i in range(k):
        for j in range(k):
            taps.append(xp[:, i: i + stride * (Ho - 1) + 1: stride,
                            j: j + stride * (Wo - 1) + 1: stride, :])
    return jnp.max(jnp.stack(taps, axis=0), axis=0)


def avg_pool_3x3(x, stride):
    """AvgPool2d(3, stride, padding=1, count_include_pad=False)."""
    N, H, W, C = x.shape
    k, p = 3, 1
    xp = jnp.pad(x, ((0, 0), (p, p), (p, p), (0, 0)))
    ones = jnp.pad(jnp.ones((N, H, W, 1), x.dtype), ((0, 0), (p, p), (p, p), (0, 0)))
    Ho = (H + 2 * p - k) // stride + 1
    Wo = (W + 2 * p - k) // stride + 1
    s = 0.0
    cnt = 0.0
    for i in range(k):
        for j in range(k):
            s = s + xp[:, i: i + stride * (Ho - 1) + 1: stride,
                        j: j + stride * (Wo - 1) + 1: stride, :]
            cnt = cnt + ones[:, i: i + stride * (Ho - 1) + 1: stride,
                              j: j + stride * (Wo - 1) + 1: stride, :]
    return s / cnt


def channel_shuffle_nhwc(x, groups):
    N, H, W, C = x.shape
    cpg = C // groups
    x = x.reshape(N, H, W, groups, cpg)
    x = jnp.swapaxes(x, 3, 4)
    return x.reshape(N, H, W, C)


# ----------------------------------------------------------------------------
# Network pieces
# ----------------------------------------------------------------------------
def stem_forward(x, w):
    Nb = x.shape[0]
    Cout = w.shape[-1]
    A, Ho, Wo = im2col(x, 3, 3, 1, 1, 1)
    out = fused_matmul(A, w.reshape(-1, Cout),
                       jnp.ones((Cout,), jnp.float32),
                       jnp.zeros((Cout,), jnp.float32),
                       relu_a=False, bn=True)
    return out.reshape(Nb, Ho, Wo, Cout)


def preprocess_pair(s0, s1, cell):
    """Both cell preprocessings (FactorizedReduce / ReLUConvBN 1x1) in one call."""
    Nb = s0.shape[0]
    C = cell['C']
    groups, blocks, scales = [], [], []
    if cell['pre0']['type'] == 'fr':
        A1, Ho, Wo = im2col(s0, 1, 1, 2, 0, 1)
        A2, _, _ = im2col(s0[:, 1:, 1:, :], 1, 1, 2, 0, 1)
        w1, w2 = cell['pre0']['w1'], cell['pre0']['w2']
        groups += [A1, A2]
        blocks += [w1.reshape(w1.shape[2], w1.shape[3]),
                   w2.reshape(w2.shape[2], w2.shape[3])]
        scales += [1.0, 1.0]
        n_pre0 = 2
    else:
        A0, Ho, Wo = im2col(s0, 1, 1, 1, 0, 1)
        w = cell['pre0']['w']
        groups.append(A0)
        blocks.append(w.reshape(w.shape[2], w.shape[3]))
        scales.append(1.0)
        n_pre0 = 1
    A1b, Ho1, Wo1 = im2col(s1, 1, 1, 1, 0, 1)
    w = cell['pre1']['w']
    groups.append(A1b)
    blocks.append(w.reshape(w.shape[2], w.shape[3]))
    scales.append(1.0)

    outs = fused_slab(groups, blocks, scales, relu_a=True, bn=True)
    if n_pre0 == 2:
        s0p = jnp.concatenate(outs[:2], axis=1).reshape(Nb, Ho, Wo, C)
    else:
        s0p = outs[0].reshape(Nb, Ho, Wo, C)
    s1p = outs[n_pre0].reshape(Nb, Ho1, Wo1, C)
    return s0p, s1p


def _stage1_blocks(xtemp, w8, p, stride, ew):
    """Stage-1 conv branches of one MixedOp edge (all share input xtemp):
    [sep3 dw1+pw1, sep5 dw1+pw1, dil3, dil5, (+ FactorizedReduce halves)]."""
    c = xtemp.shape[-1]
    groups, blocks, scales = [], [], []
    A, Ho, Wo = im2col(xtemp, 3, 3, stride, 1, 1)
    groups.append(A)
    blocks.append(dw_pw_weight(p['sep3']['dw1'], p['sep3']['pw1']))
    scales.append(1.0)                              # feeds sep3 stage-2
    A, _, _ = im2col(xtemp, 5, 5, stride, 2, 1)
    groups.append(A)
    blocks.append(dw_pw_weight(p['sep5']['dw1'], p['sep5']['pw1']))
    scales.append(1.0)                              # feeds sep5 stage-2
    A, _, _ = im2col(xtemp, 3, 3, stride, 2, 2)
    groups.append(A)
    blocks.append(dw_pw_weight(p['dil3']['dw'], p['dil3']['pw']))
    scales.append(w8[6] * ew)                       # dil_conv_3x3 output
    A, _, _ = im2col(xtemp, 5, 5, stride, 4, 2)
    groups.append(A)
    blocks.append(dw_pw_weight(p['dil5']['dw'], p['dil5']['pw']))
    scales.append(w8[7] * ew)                       # dil_conv_5x5 output
    if stride == 2:                                 # skip_connect -> FactorizedReduce
        A1, _, _ = im2col(xtemp, 1, 1, 2, 0, 1)
        A2, _, _ = im2col(xtemp[:, 1:, 1:, :], 1, 1, 2, 0, 1)
        groups += [A1, A2]
        blocks += [p['fr_w1'].reshape(c, -1), p['fr_w2'].reshape(c, -1)]
        scales += [w8[3] * ew, w8[3] * ew]
    return groups, blocks, scales, (Ho, Wo)


def process_step(edges, c):
    """Run ALL MixedOp edges of one cell step together (stride-2 and stride-1
    edges share the same output spatial size, hence the same M row layout).
    Returns sum_j weights2_j * MixedOp(h_j, weights_j)."""
    Nb = edges[0]['h'].shape[0]

    # ---- stage 1: every conv branch of every edge in ONE Pallas call --------
    g1, b1, s1, per_edge_nblk = [], [], [], []
    Ho = Wo = None
    for e in edges:
        xt = e['h'][..., :c]
        g, b, s, (Ho, Wo) = _stage1_blocks(xt, e['w8'], e['p'], e['stride'], e['ew'])
        g1 += g
        b1 += b
        s1 += s
        per_edge_nblk.append(len(b))
    outs1 = fused_slab(g1, b1, s1, relu_a=True, bn=True)

    # ---- stage 2: second dw+pw of sep_conv_3x3 / 5x5, again ONE call --------
    g2, b2, s2 = [], [], []
    base = 0
    for e, nblk in zip(edges, per_edge_nblk):
        y3 = outs1[base + 0].reshape(Nb, Ho, Wo, c)
        y5 = outs1[base + 1].reshape(Nb, Ho, Wo, c)
        A3, _, _ = im2col(y3, 3, 3, 1, 1, 1)
        A5, _, _ = im2col(y5, 5, 5, 1, 2, 1)
        g2 += [A3, A5]
        b2 += [dw_pw_weight(e['p']['sep3']['dw2'], e['p']['sep3']['pw2']),
               dw_pw_weight(e['p']['sep5']['dw2'], e['p']['sep5']['pw2'])]
        s2 += [e['w8'][4] * e['ew'], e['w8'][5] * e['ew']]
        base += nblk
    outs2 = fused_slab(g2, b2, s2, relu_a=True, bn=True)

    # ---- per-edge epilogue: pools / skip / concat / channel shuffle (JAX) ---
    total = None
    base = 0
    for idx, (e, nblk) in enumerate(zip(edges, per_edge_nblk)):
        w8, ew, stride = e['w8'], e['ew'], e['stride']
        conv = outs2[2 * idx] + outs2[2 * idx + 1] + outs1[base + 2] + outs1[base + 3]
        if stride == 2:
            conv = conv + jnp.concatenate([outs1[base + 4], outs1[base + 5]], axis=1)
        temp1 = conv.reshape(Nb, Ho, Wo, c)
        xt = e['h'][..., :c]
        xt2 = e['h'][..., c:]
        temp1 = (temp1
                 + (w8[1] * ew) * batchnorm(max_pool(xt, 3, stride, 1))
                 + (w8[2] * ew) * batchnorm(avg_pool_3x3(xt, stride)))
        # 'none' branch contributes zeros and is skipped.
        if stride == 1:
            temp1 = temp1 + (w8[3] * ew) * xt                      # skip_connect
            ans = jnp.concatenate([temp1, ew * xt2], axis=-1)
        else:
            ans = jnp.concatenate([temp1, ew * max_pool(xt2, 2, 2, 0)], axis=-1)
        ans = channel_shuffle_nhwc(ans, 4)
        total = ans if total is None else total + ans
        base += nblk
    return total


def cell_forward(cell, s0, s1, weights, weights2, steps, multiplier):
    s0, s1 = preprocess_pair(s0, s1, cell)
    C = cell['C']
    c = C // 4
    states = [s0, s1]
    offset = 0
    for i in range(steps):
        edges = []
        for j, h in enumerate(states):
            op = cell['ops'][offset + j]
            edges.append(dict(h=h, w8=weights[offset + j], ew=weights2[offset + j],
                              p=op['p'], stride=op['stride']))
        s_new = process_step(edges, c)
        offset += len(states)
        states.append(s_new)
    return jnp.concatenate(states[-multiplier:], axis=-1)


def compute_weights2(betas, steps):
    parts = [jax.nn.softmax(betas[0:2])]
    start, n = 2, 3
    for _ in range(steps - 1):
        end = start + n
        parts.append(jax.nn.softmax(betas[start:end]))
        start = end
        n += 1
    return jnp.concatenate(parts)


def network_forward(params, x):
    """x: NCHW (PyTorch convention), channels == 1 or 3."""
    N, Cin, H, W = x.shape
    x = jnp.broadcast_to(x, (N, 3, H, W))          # input.expand(N, 3, H, W)
    x = jnp.transpose(x, (0, 2, 3, 1))             # -> NHWC
    steps, multiplier = params['steps'], params['multiplier']

    # Architecture weights computed once (shared by all cells of each type).
    w_normal = jax.nn.softmax(params['alphas_normal'], axis=-1)
    w2_normal = compute_weights2(params['betas_normal'], steps)
    w_reduce = jax.nn.softmax(params['alphas_reduce'], axis=-1)
    w2_reduce = compute_weights2(params['betas_reduce'], steps)

    s0 = s1 = stem_forward(x, params['stem_w'])
    for cell in params['cells']:
        if cell['reduction']:
            weights, weights2 = w_reduce, w2_reduce
        else:
            weights, weights2 = w_normal, w2_normal
        s0, s1 = s1, cell_forward(cell, s0, s1, weights, weights2, steps, multiplier)

    out = jnp.mean(s1, axis=(1, 2))                # AdaptiveAvgPool2d(1) + flatten
    num_classes = params['fc_w'].shape[-1]
    logits = fused_matmul(out, params['fc_w'],
                          jnp.ones((num_classes,), jnp.float32),
                          params['fc_b'], relu_a=False, bn=False)
    return logits


# ----------------------------------------------------------------------------
# Deterministic parameter initialization (shapes from the module __init__)
# ----------------------------------------------------------------------------
class KeyGen:
    def __init__(self, key):
        self.key = key

    def __call__(self):
        self.key, sub = jax.random.split(self.key)
        return sub


def _normal(key, shape, scale=0.1):
    return scale * jax.random.normal(key, shape, dtype=jnp.float32)


def init_mixed_op_params(kg, c, stride):
    p = {}
    if stride != 1:
        p['fr_w1'] = _normal(kg(), (1, 1, c, c // 2))
        p['fr_w2'] = _normal(kg(), (1, 1, c, c // 2))
    p['sep3'] = dict(dw1=_normal(kg(), (3, 3, c)), pw1=_normal(kg(), (1, 1, c, c)),
                     dw2=_normal(kg(), (3, 3, c)), pw2=_normal(kg(), (1, 1, c, c)))
    p['sep5'] = dict(dw1=_normal(kg(), (5, 5, c)), pw1=_normal(kg(), (1, 1, c, c)),
                     dw2=_normal(kg(), (5, 5, c)), pw2=_normal(kg(), (1, 1, c, c)))
    p['dil3'] = dict(dw=_normal(kg(), (3, 3, c)), pw=_normal(kg(), (1, 1, c, c)))
    p['dil5'] = dict(dw=_normal(kg(), (5, 5, c)), pw=_normal(kg(), (1, 1, c, c)))
    return p


def init_cell_params(kg, C_pp, C_p, C, reduction, reduction_prev, steps):
    cell = {'reduction': reduction, 'C': C}
    if reduction_prev:
        cell['pre0'] = {'type': 'fr',
                        'w1': _normal(kg(), (1, 1, C_pp, C // 2)),
                        'w2': _normal(kg(), (1, 1, C_pp, C // 2))}
    else:
        cell['pre0'] = {'type': 'rcb', 'w': _normal(kg(), (1, 1, C_pp, C))}
    cell['pre1'] = {'w': _normal(kg(), (1, 1, C_p, C))}
    ops = []
    for i in range(steps):
        for j in range(2 + i):
            stride = 2 if reduction and j < 2 else 1
            ops.append({'stride': stride,
                        'p': init_mixed_op_params(kg, C // 4, stride)})
    cell['ops'] = ops
    return cell


def init_network_params(key, C=8, num_classes=10, layers=3,
                        steps=4, multiplier=4, stem_multiplier=3):
    kg = KeyGen(key)
    params = {'steps': steps, 'multiplier': multiplier}
    C_curr = stem_multiplier * C
    params['stem_w'] = _normal(kg(), (3, 3, 3, C_curr))
    C_pp, C_p, C_curr = C_curr, C_curr, C
    cells = []
    reduction_prev = False
    for i in range(layers):
        if i in [layers // 3, 2 * layers // 3]:
            C_curr *= 2
            reduction = True
        else:
            reduction = False
        cells.append(init_cell_params(kg, C_pp, C_p, C_curr,
                                      reduction, reduction_prev, steps))
        reduction_prev = reduction
        C_pp, C_p = C_p, multiplier * C_curr
    params['cells'] = cells
    params['fc_w'] = _normal(kg(), (C_p, num_classes))
    params['fc_b'] = jnp.zeros((num_classes,), jnp.float32)

    k_arch = sum(2 + i for i in range(steps))      # 14 edges
    num_ops = len(PRIMITIVES)                      # 8
    params['alphas_normal'] = 1e-3 * jax.random.normal(kg(), (k_arch, num_ops))
    params['alphas_reduce'] = 1e-3 * jax.random.normal(kg(), (k_arch, num_ops))
    params['betas_normal'] = 1e-3 * jax.random.normal(kg(), (k_arch,))
    params['betas_reduce'] = 1e-3 * jax.random.normal(kg(), (k_arch,))
    return params


if __name__ == "__main__":
    key = jax.random.PRNGKey(0)
    pkey, xkey = jax.random.split(key)
    # C=8, num_classes=10, layers=3 -> cell0 normal, cells 1 & 2 reduction.
    params = init_network_params(pkey, C=8, num_classes=10, layers=3)
    x = jax.random.normal(xkey, (2, 1, 16, 16), dtype=jnp.float32)  # NCHW

    # Whole forward in ONE jit: params are closed over (constant-folded block-
    # diagonal weight slabs), all glue fused, no per-op dispatch.
    forward = jax.jit(functools.partial(network_forward, params))
    logits = forward(x)
    jax.block_until_ready(logits)
    assert logits.shape == (2, 10)
    assert bool(jnp.all(jnp.isfinite(logits)))
    print("KERNEL_OK")
</pallas_src>

<mosaic_0001>
module attributes {stable_mosaic.version = 11 : i64} {
  func.func @_fused_kernel(%arg0: i32, %arg1: memref<512x27xbf16, #tpu.memory_space<vmem>>, %arg2: memref<27x24xbf16, #tpu.memory_space<vmem>>, %arg3: memref<1x24xf32, #tpu.memory_space<vmem>>, %arg4: memref<1x24xf32, #tpu.memory_space<vmem>>, %arg5: memref<512x24xf32, #tpu.memory_space<vmem>>) attributes {dimension_semantics = [#tpu.dimension_semantics<arbitrary>], iteration_bounds = array<i64: 1>, scalar_prefetch = 0 : i64, scratch_operands = 0 : i64, tpu.core_type = #tpu.core_type<tc>, window_params = [{pipeline_mode = #tpu.pipeline_mode<synchronous>, transform_indices = @transform_0, window_bounds = array<i64: 512, 27>}, {pipeline_mode = #tpu.pipeline_mode<synchronous>, transform_indices = @transform_1, window_bounds = array<i64: 27, 24>}, {pipeline_mode = #tpu.pipeline_mode<synchronous>, transform_indices = @transform_2, window_bounds = array<i64: 1, 24>}, {pipeline_mode = #tpu.pipeline_mode<synchronous>, transform_indices = @transform_3, window_bounds = array<i64: 1, 24>}, {pipeline_mode = #tpu.pipeline_mode<synchronous>, transform_indices = @transform_4, window_bounds = array<i64: 512, 24>}]} {
    %c0 = arith.constant 0 : index
    %c0_0 = arith.constant 0 : index
    %0 = vector.load %arg1[%c0, %c0_0] : memref<512x27xbf16, #tpu.memory_space<vmem>>, vector<512x27xbf16>
    %c0_1 = arith.constant 0 : index
    %c0_2 = arith.constant 0 : index
    %1 = vector.load %arg2[%c0_1, %c0_2] : memref<27x24xbf16, #tpu.memory_space<vmem>>, vector<27x24xbf16>
    %cst = arith.constant dense<0.000000e+00> : vector<512x24xf32>
    %2 = tpu.matmul %0, %1, %cst {dimension_numbers = #tpu.dot_dimension_numbers<[1], [0], [0], [1], [0, 0, 1, 1], [], []>} : vector<512x27xbf16>, vector<27x24xbf16>, vector<512x24xf32> -> vector<512x24xf32>
    %cst_3 = arith.constant dense<0.000000e+00> : vector<24xf32>
    %3 = vector.multi_reduction <add>, %2, %cst_3 [0] : vector<512x24xf32> to vector<24xf32>
    %4 = vector.shape_cast %3 : vector<24xf32> to vector<1x24xf32>
    %cst_4 = arith.constant 5.120000e+02 : f32
    %5 = vector.broadcast %cst_4 : f32 to vector<1x24xf32>
    %6 = arith.divf %4, %5 : vector<1x24xf32>
    %7 = vector.broadcast %6 : vector<1x24xf32> to vector<512x24xf32>
    %8 = arith.subf %2, %7 : vector<512x24xf32>
    %9 = arith.mulf %8, %8 : vector<512x24xf32>
    %cst_5 = arith.constant dense<0.000000e+00> : vector<24xf32>
    %10 = vector.multi_reduction <add>, %9, %cst_5 [0] : vector<512x24xf32> to vector<24xf32>
    %11 = vector.shape_cast %10 : vector<24xf32> to vector<1x24xf32>
    %cst_6 = arith.constant 5.120000e+02 : f32
    %12 = vector.broadcast %cst_6 : f32 to vector<1x24xf32>
    %13 = arith.divf %11, %12 : vector<1x24xf32>
    %14 = vector.broadcast %6 : vector<1x24xf32> to vector<512x24xf32>
    %15 = arith.subf %2, %14 : vector<512x24xf32>
    %cst_7 = arith.constant 9.99999974E-6 : f32
    %16 = vector.broadcast %cst_7 : f32 to vector<1x24xf32>
    %17 = arith.addf %13, %16 : vector<1x24xf32>
    %18 = math.rsqrt %17 : vector<1x24xf32>
    %19 = vector.broadcast %18 : vector<1x24xf32> to vector<512x24xf32>
    %20 = arith.mulf %15, %19 : vector<512x24xf32>
    %c0_8 = arith.constant 0 : index
    %c0_9 = arith.constant 0 : index
    %21 = vector.load %arg3[%c0_8, %c0_9] : memref<1x24xf32, #tpu.memory_space<vmem>>, vector<1x24xf32>
    %22 = vector.broadcast %21 : vector<1x24xf32> to vector<512x24xf32>
    %23 = arith.mulf %20, %22 : vector<512x24xf32>
    %c0_10 = arith.constant 0 : index
    %c0_11 = arith.constant 0 : index
    %24 = vector.load %arg4[%c0_10, %c0_11] : memref<1x24xf32, #tpu.memory_space<vmem>>, vector<1x24xf32>
    %25 = vector.broadcast %24 : vector<1x24xf32> to vector<512x24xf32>
    %26 = arith.addf %23, %25 : vector<512x24xf32>
    %c0_12 = arith.constant 0 : index
    %c0_13 = arith.constant 0 : index
    %27 = vector.load %arg5[%c0_12, %c0_13] : memref<512x24xf32, #tpu.memory_space<vmem>>, vector<512x24xf32>
    tpu.vector_store %arg5[%c0_12, %c0_13], %26 {strides = array<i32>} : memref<512x24xf32, #tpu.memory_space<vmem>>, vector<512x24xf32>,
    return
  }
  func.func @transform_0(%arg0: i32) -> (i32, i32) {
    %c0_i32 = arith.constant 0 : i32
    %c0_i32_0 = arith.constant 0 : i32
    %c0_i32_1 = arith.constant 0 : i32
    return %c0_i32, %c0_i32_0 : i32, i32
  }
  func.func @transform_1(%arg0: i32) -> (i32, i32) {
    %c0_i32 = arith.constant 0 : i32
    %c0_i32_0 = arith.constant 0 : i32
    %c0_i32_1 = arith.constant 0 : i32
    return %c0_i32, %c0_i32_0 : i32, i32
  }
  func.func @transform_2(%arg0: i32) -> (i32, i32) {
    %c0_i32 = arith.constant 0 : i32
    %c0_i32_0 = arith.constant 0 : i32
    %c0_i32_1 = arith.constant 0 : i32
    return %c0_i32, %c0_i32_0 : i32, i32
  }
  func.func @transform_3(%arg0: i32) -> (i32, i32) {
    %c0_i32 = arith.constant 0 : i32
    %c0_i32_0 = arith.constant 0 : i32
    %c0_i32_1 = arith.constant 0 : i32
    return %c0_i32, %c0_i32_0 : i32, i32
  }
  func.func @transform_4(%arg0: i32) -> (i32, i32) {
    %c0_i32 = arith.constant 0 : i32
    %c0_i32_0 = arith.constant 0 : i32
    %c0_i32_1 = arith.constant 0 : i32
    return %c0_i32, %c0_i32_0 : i32, i32
  }
}

</mosaic_0001>

<llo_original>
// kernel: fused_matmul.1
$region0: #{fused_matmul.1}
  #allocation0 [shape = 'u32[]', space=smem, size = 0x4, offset = 0x4, fixed_abs, tag = 'smem constant byte address 0x4 - core index']
  #allocation1 [shape = 'u32[72,128]{1,0:T(1,128)}', space=vmem, size = 0x9000, scoped, tag = 'internal scratch']
  %s0 = inlined_call_operand.vmem [shape: bf16[512,27], index: 0, kind: input, shape index: {}]
  %s1 = inlined_call_operand.vmem [shape: bf16[27,24], index: 1, kind: input, shape index: {}]
  %s2 = inlined_call_operand.vmem [shape: f32[1,24], index: 2, kind: input, shape index: {}]
  %s3 = inlined_call_operand.vmem [shape: f32[1,24], index: 3, kind: input, shape index: {}]
  %s4 = inlined_call_operand.vmem [shape: f32[512,24], index: 4, kind: output, shape index: {}]
  %s5 = sld [smem:[#allocation0]]
  $region26: #{fused_matmul.1} parent=0
    _
  %s7 = ssub.s32 1, %s5
  %s8 = scalar_select 0, %s7, %s5
  // Predicated region
  $region2: #{fused_matmul.1} parent=0 // pred_check
    _
  $region3: #{fused_matmul.1} parent=0 // pred_check_branch
    %10 = sbr.rel (0) target = $region5
  $region4: #{fused_matmul.1} parent=0 // pred_region
    _
  $region5: #{fused_matmul.1} parent=0 // pred_fallthru
    _
  // Predicated region
  $region6: #{fused_matmul.1} parent=0 // pred_check
    _
  $region7: #{fused_matmul.1} parent=0 // pred_check_branch
    %12 = sbr.rel (0) target = $region9
  $region8: #{fused_matmul.1} parent=0 // pred_region
    _
  $region9: #{fused_matmul.1} parent=0 // pred_fallthru
    _
  // Predicated region
  $region10: #{fused_matmul.1} parent=0 // pred_check
    _
  $region11: #{fused_matmul.1} parent=0 // pred_check_branch
    %14 = sbr.rel (0) target = $region13
  $region12: #{fused_matmul.1} parent=0 // pred_region
    _
  $region13: #{fused_matmul.1} parent=0 // pred_fallthru
    _
  // Predicated region
  $region14: #{fused_matmul.1} parent=0 // pred_check
    _
  $region15: #{fused_matmul.1} parent=0 // pred_check_branch
    %16 = sbr.rel (0) target = $region17
  $region16: #{fused_matmul.1} parent=0 // pred_region
    _
  $region17: #{fused_matmul.1} parent=0 // pred_fallthru
    _
  %v18 = vld [vmem:[%s0] sm:$0xf]
  %v19 = vld [vmem:[%s0 + $0x4] sm:$0xf]
  %v20 = vld [vmem:[%s0 + $0x8] sm:$0xf]
  %v21 = vld [vmem:[%s0 + $0xc] sm:$0xf]
  %v22 = vld [vmem:[%s0 + $0x10] sm:$0xf]
  %v23 = vld [vmem:[%s0 + $0x14] sm:$0xf]
  %v24 = vld [vmem:[%s0 + $0x18] sm:$0xf]
  %v25 = vld [vmem:[%s0 + $0x1c] sm:$0xf]
  %v26 = vld [vmem:[%s0 + $0x20] sm:$0xf]
  %v27 = vld [vmem:[%s0 + $0x24] sm:$0xf]
  %v28 = vld [vmem:[%s0 + $0x28] sm:$0xf]
  %v29 = vld [vmem:[%s0 + $0x2c] sm:$0xf]
  %v30 = vld [vmem:[%s0 + $0x30] sm:$0xf]
  %v31 = vld [vmem:[%s0 + $0x34] sm:$0xf]
  %v32 = vld [vmem:[%s0 + $0x38] sm:$0xf]
  %v33 = vld [vmem:[%s0 + $0x3c] sm:$0xf]
  %v34 = vld [vmem:[%s0 + $0x40] sm:$0xf]
  %v35 = vld [vmem:[%s0 + $0x44] sm:$0xf]
  %v36 = vld [vmem:[%s0 + $0x48] sm:$0xf]
  %v37 = vld [vmem:[%s0 + $0x4c] sm:$0xf]
  %v38 = vld [vmem:[%s0 + $0x50] sm:$0xf]
  %v39 = vld [vmem:[%s0 + $0x54] sm:$0xf]
  %v40 = vld [vmem:[%s0 + $0x58] sm:$0xf]
  %v41 = vld [vmem:[%s0 + $0x5c] sm:$0xf]
  %v42 = vld [vmem:[%s0 + $0x60] sm:$0xf]
  %v43 = vld [vmem:[%s0 + $0x64] sm:$0xf]
  %v44 = vld [vmem:[%s0 + $0x68] sm:$0xf]
  %v45 = vld [vmem:[%s0 + $0x6c] sm:$0xf]
  %v46 = vld [vmem:[%s0 + $0x70] sm:$0xf]
  %v47 = vld [vmem:[%s0 + $0x74] sm:$0xf]
  %v48 = vld [vmem:[%s0 + $0x78] sm:$0xf]
  %v49 = vld [vmem:[%s0 + $0x7c] sm:$0xf]
  %v50 = vld [vmem:[%s0 + $0x80] sm:$0xf]
  %v51 = vld [vmem:[%s0 + $0x84] sm:$0xf]
  %v52 = vld [vmem:[%s0 + $0x88] sm:$0xf]
  %v53 = vld [vmem:[%s0 + $0x8c] sm:$0xf]
  %v54 = vld [vmem:[%s0 + $0x90] sm:$0xf]
  %v55 = vld [vmem:[%s0 + $0x94] sm:$0xf]
  %v56 = vld [vmem:[%s0 + $0x98] sm:$0xf]
  %v57 = vld [vmem:[%s0 + $0x9c] sm:$0xf]
  %v58 = vld [vmem:[%s0 + $0xa0] sm:$0xf]
  %v59 = vld [vmem:[%s0 + $0xa4] sm:$0xf]
  %v60 = vld [vmem:[%s0 + $0xa8] sm:$0xf]
  %v61 = vld [vmem:[%s0 + $0xac] sm:$0xf]
  %v62 = vld [vmem:[%s0 + $0xb0] sm:$0xf]
  %v63 = vld [vmem:[%s0 + $0xb4] sm:$0xf]
  %v64 = vld [vmem:[%s0 + $0xb8] sm:$0xf]
  %v65 = vld [vmem:[%s0 + $0xbc] sm:$0xf]
  %v66 = vld [vmem:[%s0 + $0xc0] sm:$0xf]
  %v67 = vld [vmem:[%s0 + $0xc4] sm:$0xf]
  %v68 = vld [vmem:[%s0 + $0xc8] sm:$0xf]
  %v69 = vld [vmem:[%s0 + $0xcc] sm:$0xf]
  %v70 = vld [vmem:[%s0 + $0xd0] sm:$0xf]
  %v71 = vld [vmem:[%s0 + $0xd4] sm:$0xf]
  %v72 = vld [vmem:[%s0 + $0xd8] sm:$0xf]
  %v73 = vld [vmem:[%s0 + $0xdc] sm:$0xf]
  %v74 = vld [vmem:[%s0 + $0xe0] sm:$0xf]
  %v75 = vld [vmem:[%s0 + $0xe4] sm:$0xf]
  %v76 = vld [vmem:[%s0 + $0xe8] sm:$0xf]
  %v77 = vld [vmem:[%s0 + $0xec] sm:$0xf]
  %v78 = vld [vmem:[%s0 + $0xf0] sm:$0xf]
  %v79 = vld [vmem:[%s0 + $0xf4] sm:$0xf]
  %v80 = vld [vmem:[%s0 + $0xf8] sm:$0xf]
  %v81 = vld [vmem:[%s0 + $0xfc] sm:$0xf]
  %v82 = vld [vmem:[%s1] sm:$0xf]
  %v83 = vld [vmem:[%s1 + $0x4] sm:$0xf]
  %v84 = vld [vmem:[%s1 + $0x8] sm:$0xf]
  %v85 = vld [vmem:[%s1 + $0xc] sm:$0x3]
  %v150 = vunpack.c.l.b16 %v18
  %v151 = vunpack.c.l.b16 %v19
  %v152 = vunpack.c.l.b16 %v20
  %v153 = vunpack.c.l.b16 %v21
  %v154 = vunpack.c.l.b16 %v22
  %v155 = vunpack.c.l.b16 %v23
  %v156 = vunpack.c.l.b16 %v24
  %v157 = vunpack.c.l.b16 %v25
  %v158 = vunpack.c.l.b16 %v26
  %v159 = vunpack.c.l.b16 %v27
  %v160 = vunpack.c.l.b16 %v28
  %v161 = vunpack.c.l.b16 %v29
  %v162 = vunpack.c.l.b16 %v30
  %v163 = vunpack.c.l.b16 %v31
  %v164 = vunpack.c.l.b16 %v32
  %v165 = vunpack.c.l.b16 %v33
  %v166 = vunpack.c.l.b16 %v34
  %v167 = vunpack.c.l.b16 %v35
  %v168 = vunpack.c.l.b16 %v36
  %v169 = vunpack.c.l.b16 %v37
  %v170 = vunpack.c.l.b16 %v38
  %v171 = vunpack.c.l.b16 %v39
  %v172 = vunpack.c.l.b16 %v40
  %v173 = vunpack.c.l.b16 %v41
  %v174 = vunpack.c.l.b16 %v42
  %v175 = vunpack.c.l.b16 %v43
  %v176 = vunpack.c.l.b16 %v44
  %v177 = vunpack.c.l.b16 %v45
  %v178 = vunpack.c.l.b16 %v46
  %v179 = vunpack.c.l.b16 %v47
  %v180 = vunpack.c.l.b16 %v48
  %v181 = vunpack.c.l.b16 %v49
  %v182 = vunpack.c.l.b16 %v50
  %v183 = vunpack.c.l.b16 %v51
  %v184 = vunpack.c.l.b16 %v52
  %v185 = vunpack.c.l.b16 %v53
  %v186 = vunpack.c.l.b16 %v54
  %v187 = vunpack.c.l.b16 %v55
  %v188 = vunpack.c.l.b16 %v56
  %v189 = vunpack.c.l.b16 %v57
  %v190 = vunpack.c.l.b16 %v58
  %v191 = vunpack.c.l.b16 %v59
  %v192 = vunpack.c.l.b16 %v60
  %v193 = vunpack.c.l.b16 %v61
  %v194 = vunpack.c.l.b16 %v62
  %v195 = vunpack.c.l.b16 %v63
  %v196 = vunpack.c.l.b16 %v64
  %v197 = vunpack.c.l.b16 %v65
  %v198 = vunpack.c.l.b16 %v66
  %v199 = vunpack.c.l.b16 %v67
  %v200 = vunpack.c.l.b16 %v68
  %v201 = vunpack.c.l.b16 %v69
  %v202 = vunpack.c.l.b16 %v70
  %v203 = vunpack.c.l.b16 %v71
  %v204 = vunpack.c.l.b16 %v72
  %v205 = vunpack.c.l.b16 %v73
  %v206 = vunpack.c.l.b16 %v74
  %v207 = vunpack.c.l.b16 %v75
  %v208 = vunpack.c.l.b16 %v76
  %v209 = vunpack.c.l.b16 %v77
  %v210 = vunpack.c.l.b16 %v78
  %v211 = vunpack.c.l.b16 %v79
  %v212 = vunpack.c.l.b16 %v80
  %v213 = vunpack.c.l.b16 %v81
  %v214 = vpack.c.b16 %v151, %v150
  %v215 = vpack.c.b16 %v153, %v152
  %v216 = vpack.c.b16 %v155, %v154
  %v217 = vpack.c.b16 %v157, %v156
  %v218 = vpack.c.b16 %v159, %v158
  %v219 = vpack.c.b16 %v161, %v160
  %v220 = vpack.c.b16 %v163, %v162
  %v221 = vpack.c.b16 %v165, %v164
  %v222 = vpack.c.b16 %v167, %v166
  %v223 = vpack.c.b16 %v169, %v168
  %v224 = vpack.c.b16 %v171, %v170
  %v225 = vpack.c.b16 %v173, %v172
  %v226 = vpack.c.b16 %v175, %v174
  %v227 = vpack.c.b16 %v177, %v176
  %v228 = vpack.c.b16 %v179, %v178
  %v229 = vpack.c.b16 %v181, %v180
  %v230 = vpack.c.b16 %v183, %v182
  %v231 = vpack.c.b16 %v185, %v184
  %v232 = vpack.c.b16 %v187, %v186
  %v233 = vpack.c.b16 %v189, %v188
  %v234 = vpack.c.b16 %v191, %v190
  %v235 = vpack.c.b16 %v193, %v192
  %v236 = vpack.c.b16 %v195, %v194
  %v237 = vpack.c.b16 %v197, %v196
  %v238 = vpack.c.b16 %v199, %v198
  %v239 = vpack.c.b16 %v201, %v200
  %v240 = vpack.c.b16 %v203, %v202
  %v241 = vpack.c.b16 %v205, %v204
  %v242 = vpack.c.b16 %v207, %v206
  %v243 = vpack.c.b16 %v209, %v208
  %v244 = vpack.c.b16 %v211, %v210
  %v245 = vpack.c.b16 %v213, %v212
  %v250 = vunpack.c.l.b16 %v82
  %v251 = vunpack.c.l.b16 %v83
  %v252 = vunpack.c.l.b16 %v84
  %v253 = vunpack.c.l.b16 %v85
  %v254 = vpack.c.b16 %v251, %v250
  %v255 = vpack.c.b16 %v253, %v252
  %vm257 = vcmask 220160
  %v259 = vsel %vm257, %v214, 0
  %v262 = vsel %vm257, %v215, 0
  %v265 = vsel %vm257, %v216, 0
  %v268 = vsel %vm257, %v217, 0
  %v271 = vsel %vm257, %v218, 0
  %v274 = vsel %vm257, %v219, 0
  %v277 = vsel %vm257, %v220, 0
  %v280 = vsel %vm257, %v221, 0
  %v283 = vsel %vm257, %v222, 0
  %v286 = vsel %vm257, %v223, 0
  %v289 = vsel %vm257, %v224, 0
  %v292 = vsel %vm257, %v225, 0
  %v295 = vsel %vm257, %v226, 0
  %v298 = vsel %vm257, %v227, 0
  %v301 = vsel %vm257, %v228, 0
  %v304 = vsel %vm257, %v229, 0
  %v307 = vsel %vm257, %v230, 0
  %v310 = vsel %vm257, %v231, 0
  %v313 = vsel %vm257, %v232, 0
  %v316 = vsel %vm257, %v233, 0
  %v319 = vsel %vm257, %v234, 0
  %v322 = vsel %vm257, %v235, 0
  %v325 = vsel %vm257, %v236, 0
  %v328 = vsel %vm257, %v237, 0
  %v331 = vsel %vm257, %v238, 0
  %v334 = vsel %vm257, %v239, 0
  %v337 = vsel %vm257, %v240, 0
  %v340 = vsel %vm257, %v241, 0
  %v343 = vsel %vm257, %v242, 0
  %v346 = vsel %vm257, %v243, 0
  %v349 = vsel %vm257, %v244, 0
  %v352 = vsel %vm257, %v245, 0
  %vm354 = vcmask 1044480
  %vm355 = vcmask 1045504
  %v356 = vsel %vm354, 4294967295, 65535
  %v357 = vsel %vm355, %v356, 0
  %v359 = vand.u32 %v255, %v357
  %361 = vmatpush.bf16.msra.mxu0 0
  %362 = vmatpush.bf16.msra.mxu0 0
  %363 = vmatpush.bf16.msra.mxu0 0
  %364 = vmatpush.bf16.msra.mxu0 0
  %365 = vmatpush.bf16.msra.mxu0 0
  %366 = vmatpush.bf16.msra.mxu0 0
  %367 = vmatpush.bf16.msra.mxu0 %v359
  %368 = vmatpush.bf16.msra.mxu0 %v254
  %369 = vmatmul.bf16.gmra.mxu0 %v259
  %v370 = vpop.f32.mrf.mxu0
  %v371 = vadd.f32 0.0, %v370
  %v372 = vpop.f32.mrf.mxu0
  %v373 = vadd.f32 0.0, %v372
  %374 = vmatmul.bf16.gmra.mxu0 %v262
  %v375 = vpop.f32.mrf.mxu0
  %v376 = vadd.f32 0.0, %v375
  %v377 = vpop.f32.mrf.mxu0
  %v378 = vadd.f32 0.0, %v377
  %379 = vmatmul.bf16.gmra.mxu0 %v265
  %v380 = vpop.f32.mrf.mxu0
  %v381 = vadd.f32 0.0, %v380
  %v382 = vpop.f32.mrf.mxu0
  %v383 = vadd.f32 0.0, %v382
  %384 = vmatmul.bf16.gmra.mxu0 %v268
  %v385 = vpop.f32.mrf.mxu0
  %v386 = vadd.f32 0.0, %v385
  %v387 = vpop.f32.mrf.mxu0
  %v388 = vadd.f32 0.0, %v387
  %389 = vmatmul.bf16.gmra.mxu0 %v271
  %v390 = vpop.f32.mrf.mxu0
  %v391 = vadd.f32 0.0, %v390
  %v392 = vpop.f32.mrf.mxu0
  %v393 = vadd.f32 0.0, %v392
  %394 = vmatmul.bf16.gmra.mxu0 %v274
  %v395 = vpop.f32.mrf.mxu0
  %v396 = vadd.f32 0.0, %v395
  %v397 = vpop.f32.mrf.mxu0
  %v398 = vadd.f32 0.0, %v397
  %399 = vmatmul.bf16.gmra.mxu0 %v277
  %v400 = vpop.f32.mrf.mxu0
  %v401 = vadd.f32 0.0, %v400
  %v402 = vpop.f32.mrf.mxu0
  %v403 = vadd.f32 0.0, %v402
  %404 = vmatmul.bf16.gmra.mxu0 %v280
  %v405 = vpop.f32.mrf.mxu0
  %v406 = vadd.f32 0.0, %v405
  %v407 = vpop.f32.mrf.mxu0
  %v408 = vadd.f32 0.0, %v407
  %409 = vmatmul.bf16.gmra.mxu0 %v283
  %v410 = vpop.f32.mrf.mxu0
  %v411 = vadd.f32 0.0, %v410
  %v412 = vpop.f32.mrf.mxu0
  %v413 = vadd.f32 0.0, %v412
  %414 = vmatmul.bf16.gmra.mxu0 %v286
  %v415 = vpop.f32.mrf.mxu0
  %v416 = vadd.f32 0.0, %v415
  %v417 = vpop.f32.mrf.mxu0
  %v418 = vadd.f32 0.0, %v417
  %419 = vmatmul.bf16.gmra.mxu0 %v289
  %v420 = vpop.f32.mrf.mxu0
  %v421 = vadd.f32 0.0, %v420
  %v422 = vpop.f32.mrf.mxu0
  %v423 = vadd.f32 0.0, %v422
  %424 = vmatmul.bf16.gmra.mxu0 %v292
  %v425 = vpop.f32.mrf.mxu0
  %v426 = vadd.f32 0.0, %v425
  %v427 = vpop.f32.mrf.mxu0
  %v428 = vadd.f32 0.0, %v427
  %429 = vmatmul.bf16.gmra.mxu0 %v295
  %v430 = vpop.f32.mrf.mxu0
  %v431 = vadd.f32 0.0, %v430
  %v432 = vpop.f32.mrf.mxu0
  %v433 = vadd.f32 0.0, %v432
  %434 = vmatmul.bf16.gmra.mxu0 %v298
  %v435 = vpop.f32.mrf.mxu0
  %v436 = vadd.f32 0.0, %v435
  %v437 = vpop.f32.mrf.mxu0
  %v438 = vadd.f32 0.0, %v437
  %439 = vmatmul.bf16.gmra.mxu0 %v301
  %v440 = vpop.f32.mrf.mxu0
  %v441 = vadd.f32 0.0, %v440
  %v442 = vpop.f32.mrf.mxu0
  %v443 = vadd.f32 0.0, %v442
  %444 = vmatmul.bf16.gmra.mxu0 %v304
  %v445 = vpop.f32.mrf.mxu0
  %v446 = vadd.f32 0.0, %v445
  %v447 = vpop.f32.mrf.mxu0
  %v448 = vadd.f32 0.0, %v447
  %449 = vmatmul.bf16.gmra.mxu0 %v307
  %v450 = vpop.f32.mrf.mxu0
  %v451 = vadd.f32 0.0, %v450
  %v452 = vpop.f32.mrf.mxu0
  %v453 = vadd.f32 0.0, %v452
  %454 = vmatmul.bf16.gmra.mxu0 %v310
  %v455 = vpop.f32.mrf.mxu0
  %v456 = vadd.f32 0.0, %v455
  %v457 = vpop.f32.mrf.mxu0
  %v458 = vadd.f32 0.0, %v457
  %459 = vmatmul.bf16.gmra.mxu0 %v313
  %v460 = vpop.f32.mrf.mxu0
  %v461 = vadd.f32 0.0, %v460
  %v462 = vpop.f32.mrf.mxu0
  %v463 = vadd.f32 0.0, %v462
  %464 = vmatmul.bf16.gmra.mxu0 %v316
  %v465 = vpop.f32.mrf.mxu0
  %v466 = vadd.f32 0.0, %v465
  %v467 = vpop.f32.mrf.mxu0
  %v468 = vadd.f32 0.0, %v467
  %469 = vmatmul.bf16.gmra.mxu0 %v319
  %v470 = vpop.f32.mrf.mxu0
  %v471 = vadd.f32 0.0, %v470
  %v472 = vpop.f32.mrf.mxu0
  %v473 = vadd.f32 0.0, %v472
  %474 = vmatmul.bf16.gmra.mxu0 %v322
  %v475 = vpop.f32.mrf.mxu0
  %v476 = vadd.f32 0.0, %v475
  %v477 = vpop.f32.mrf.mxu0
  %v478 = vadd.f32 0.0, %v477
  %479 = vmatmul.bf16.gmra.mxu0 %v325
  %v480 = vpop.f32.mrf.mxu0
  %v481 = vadd.f32 0.0, %v480
  %v482 = vpop.f32.mrf.mxu0
  %v483 = vadd.f32 0.0, %v482
  %484 = vmatmul.bf16.gmra.mxu0 %v328
  %v485 = vpop.f32.mrf.mxu0
  %v486 = vadd.f32 0.0, %v485
  %v487 = vpop.f32.mrf.mxu0
  %v488 = vadd.f32 0.0, %v487
  %489 = vmatmul.bf16.gmra.mxu0 %v331
  %v490 = vpop.f32.mrf.mxu0
  %v491 = vadd.f32 0.0, %v490
  %v492 = vpop.f32.mrf.mxu0
  %v493 = vadd.f32 0.0, %v492
  %494 = vmatmul.bf16.gmra.mxu0 %v334
  %v495 = vpop.f32.mrf.mxu0
  %v496 = vadd.f32 0.0, %v495
  %v497 = vpop.f32.mrf.mxu0
  %v498 = vadd.f32 0.0, %v497
  %499 = vmatmul.bf16.gmra.mxu0 %v337
  %v500 = vpop.f32.mrf.mxu0
  %v501 = vadd.f32 0.0, %v500
  %v502 = vpop.f32.mrf.mxu0
  %v503 = vadd.f32 0.0, %v502
  %504 = vmatmul.bf16.gmra.mxu0 %v340
  %v505 = vpop.f32.mrf.mxu0
  %v506 = vadd.f32 0.0, %v505
  %v507 = vpop.f32.mrf.mxu0
  %v508 = vadd.f32 0.0, %v507
  %509 = vmatmul.bf16.gmra.mxu0 %v343
  %v510 = vpop.f32.mrf.mxu0
  %v511 = vadd.f32 0.0, %v510
  %v512 = vpop.f32.mrf.mxu0
  %v513 = vadd.f32 0.0, %v512
  %514 = vmatmul.bf16.gmra.mxu0 %v346
  %v515 = vpop.f32.mrf.mxu0
  %v516 = vadd.f32 0.0, %v515
  %v517 = vpop.f32.mrf.mxu0
  %v518 = vadd.f32 0.0, %v517
  %519 = vmatmul.bf16.gmra.mxu0 %v349
  %v520 = vpop.f32.mrf.mxu0
  %v521 = vadd.f32 0.0, %v520
  %v522 = vpop.f32.mrf.mxu0
  %v523 = vadd.f32 0.0, %v522
  %524 = vmatmul.bf16.gmra.mxu0 %v352
  %v525 = vpop.f32.mrf.mxu0
  %v526 = vadd.f32 0.0, %v525
  %v527 = vpop.f32.mrf.mxu0
  %v528 = vadd.f32 0.0, %v527
  %529 = vdwg.mxu0
  %vm530 = vcmask 195584
  %v531 = vsel %vm530, %v371, 0.0
  %v532 = vsel %vm530, %v373, 0.0
  %v533 = vadd.f32 %v531, %v532
  %v534 = vsel %vm530, %v376, 0.0
  %v535 = vadd.f32 %v533, %v534
  %v536 = vsel %vm530, %v378, 0.0
  %v537 = vadd.f32 %v535, %v536
  %v538 = vsel %vm530, %v381, 0.0
  %v539 = vadd.f32 %v537, %v538
  %v540 = vsel %vm530, %v383, 0.0
  %v541 = vadd.f32 %v539, %v540
  %v542 = vsel %vm530, %v386, 0.0
  %v543 = vadd.f32 %v541, %v542
  %v544 = vsel %vm530, %v388, 0.0
  %v545 = vadd.f32 %v543, %v544
  %v546 = vsel %vm530, %v391, 0.0
  %v547 = vadd.f32 %v545, %v546
  %v548 = vsel %vm530, %v393, 0.0
  %v549 = vadd.f32 %v547, %v548
  %v550 = vsel %vm530, %v396, 0.0
  %v551 = vadd.f32 %v549, %v550
  %v552 = vsel %vm530, %v398, 0.0
  %v553 = vadd.f32 %v551, %v552
  %v554 = vsel %vm530, %v401, 0.0
  %v555 = vadd.f32 %v553, %v554
  %v556 = vsel %vm530, %v403, 0.0
  %v557 = vadd.f32 %v555, %v556
  %v558 = vsel %vm530, %v406, 0.0
  %v559 = vadd.f32 %v557, %v558
  %v560 = vsel %vm530, %v408, 0.0
  %v561 = vadd.f32 %v559, %v560
  %v562 = vsel %vm530, %v411, 0.0
  %v563 = vadd.f32 %v561, %v562
  %v564 = vsel %vm530, %v413, 0.0
  %v565 = vadd.f32 %v563, %v564
  %v566 = vsel %vm530, %v416, 0.0
  %v567 = vadd.f32 %v565, %v566
  %v568 = vsel %vm530, %v418, 0.0
  %v569 = vadd.f32 %v567, %v568
  %v570 = vsel %vm530, %v421, 0.0
  %v571 = vadd.f32 %v569, %v570
  %v572 = vsel %vm530, %v423, 0.0
  %v573 = vadd.f32 %v571, %v572
  %v574 = vsel %vm530, %v426, 0.0
  %v575 = vadd.f32 %v573, %v574
  %v576 = vsel %vm530, %v428, 0.0
  %v577 = vadd.f32 %v575, %v576
  %v578 = vsel %vm530, %v431, 0.0
  %v579 = vadd.f32 %v577, %v578
  %v580 = vsel %vm530, %v433, 0.0
  %v581 = vadd.f32 %v579, %v580
  %v582 = vsel %vm530, %v436, 0.0
  %v583 = vadd.f32 %v581, %v582
  %v584 = vsel %vm530, %v438, 0.0
  %v585 = vadd.f32 %v583, %v584
  %v586 = vsel %vm530, %v441, 0.0
  %v587 = vadd.f32 %v585, %v586
  %v588 = vsel %vm530, %v443, 0.0
  %v589 = vadd.f32 %v587, %v588
  %v590 = vsel %vm530, %v446, 0.0
  %v591 = vadd.f32 %v589, %v590
  %v592 = vsel %vm530, %v448, 0.0
  %v593 = vadd.f32 %v591, %v592
  %v594 = vsel %vm530, %v451, 0.0
  %v595 = vadd.f32 %v593, %v594
  %v596 = vsel %vm530, %v453, 0.0
  %v597 = vadd.f32 %v595, %v596
  %v598 = vsel %vm530, %v456, 0.0
  %v599 = vadd.f32 %v597, %v598
  %v600 = vsel %vm530, %v458, 0.0
  %v601 = vadd.f32 %v599, %v600
  %v602 = vsel %vm530, %v461, 0.0
  %v603 = vadd.f32 %v601, %v602
  %v604 = vsel %vm530, %v463, 0.0
  %v605 = vadd.f32 %v603, %v604
  %v606 = vsel %vm530, %v466, 0.0
  %v607 = vadd.f32 %v605, %v606
  %v608 = vsel %vm530, %v468, 0.0
  %v609 = vadd.f32 %v607, %v608
  %v610 = vsel %vm530, %v471, 0.0
  %v611 = vadd.f32 %v609, %v610
  %v612 = vsel %vm530, %v473, 0.0
  %v613 = vadd.f32 %v611, %v612
  %v614 = vsel %vm530, %v476, 0.0
  %v615 = vadd.f32 %v613, %v614
  %v616 = vsel %vm530, %v478, 0.0
  %v617 = vadd.f32 %v615, %v616
  %v618 = vsel %vm530, %v481, 0.0
  %v619 = vadd.f32 %v617, %v618
  %v620 = vsel %vm530, %v483, 0.0
  %v621 = vadd.f32 %v619, %v620
  %v622 = vsel %vm530, %v486, 0.0
  %v623 = vadd.f32 %v621, %v622
  %v624 = vsel %vm530, %v488, 0.0
  %v625 = vadd.f32 %v623, %v624
  %v626 = vsel %vm530, %v491, 0.0
  %v627 = vadd.f32 %v625, %v626
  %v628 = vsel %vm530, %v493, 0.0
  %v629 = vadd.f32 %v627, %v628
  %v630 = vsel %vm530, %v496, 0.0
  %v631 = vadd.f32 %v629, %v630
  %v632 = vsel %vm530, %v498, 0.0
  %v633 = vadd.f32 %v631, %v632
  %v634 = vsel %vm530, %v501, 0.0
  %v635 = vadd.f32 %v633, %v634
  %v636 = vsel %vm530, %v503, 0.0
  %v637 = vadd.f32 %v635, %v636
  %v638 = vsel %vm530, %v506, 0.0
  %v639 = vadd.f32 %v637, %v638
  %v640 = vsel %vm530, %v508, 0.0
  %v641 = vadd.f32 %v639, %v640
  %v642 = vsel %vm530, %v511, 0.0
  %v643 = vadd.f32 %v641, %v642
  %v644 = vsel %vm530, %v513, 0.0
  %v645 = vadd.f32 %v643, %v644
  %v646 = vsel %vm530, %v516, 0.0
  %v647 = vadd.f32 %v645, %v646
  %v648 = vsel %vm530, %v518, 0.0
  %v649 = vadd.f32 %v647, %v648
  %v650 = vsel %vm530, %v521, 0.0
  %v651 = vadd.f32 %v649, %v650
  %v652 = vsel %vm530, %v523, 0.0
  %v653 = vadd.f32 %v651, %v652
  %v654 = vsel %vm530, %v526, 0.0
  %v655 = vadd.f32 %v653, %v654
  %v656 = vsel %vm530, %v528, 0.0
  %v657 = vadd.f32 %v655, %v656
  %v658 = vrot.slane %v657, 4
  %v659 = vadd.f32 %v657, %v658
  %v660 = vrot.slane %v659, 2
  %v661 = vadd.f32 %v659, %v660
  %v662 = vrot.slane %v661, 1
  %v663 = vadd.f32 %v661, %v662
  %v664 = vrcp.pop 512.0
  %v665 = vmul.f32 512.0, %v664
  %v666 = vsub.f32 1.0, %v665
  %v667 = vmul.f32 %v664, %v666
  %v668 = vadd.f32 %v664, %v667
  %vm669 = vweird.f32 %v664
  %v670 = vsel %vm669, %v664, %v668
  %v671 = vmul.f32 %v663, %v670
  %v672 = vsub.f32 %v371, %v671
  %v673 = vsub.f32 %v373, %v671
  %v674 = vsub.f32 %v376, %v671
  %v675 = vsub.f32 %v378, %v671
  %v676 = vsub.f32 %v381, %v671
  %v677 = vsub.f32 %v383, %v671
  %v678 = vsub.f32 %v386, %v671
  %v679 = vsub.f32 %v388, %v671
  %v680 = vsub.f32 %v391, %v671
  %v681 = vsub.f32 %v393, %v671
  %v682 = vsub.f32 %v396, %v671
  %v683 = vsub.f32 %v398, %v671
  %v684 = vsub.f32 %v401, %v671
  %v685 = vsub.f32 %v403, %v671
  %v686 = vsub.f32 %v406, %v671
  %v687 = vsub.f32 %v408, %v671
  %v688 = vsub.f32 %v411, %v671
  %v689 = vsub.f32 %v413, %v671
  %v690 = vsub.f32 %v416, %v671
  %v691 = vsub.f32 %v418, %v671
  %v692 = vsub.f32 %v421, %v671
  %v693 = vsub.f32 %v423, %v671
  %v694 = vsub.f32 %v426, %v671
  %v695 = vsub.f32 %v428, %v671
  %v696 = vsub.f32 %v431, %v671
  %v697 = vsub.f32 %v433, %v671
  %v698 = vsub.f32 %v436, %v671
  %v699 = vsub.f32 %v438, %v671
  %v700 = vsub.f32 %v441, %v671
  %v701 = vsub.f32 %v443, %v671
  %v702 = vsub.f32 %v446, %v671
  %v703 = vsub.f32 %v448, %v671
  %v704 = vsub.f32 %v451, %v671
  %v705 = vsub.f32 %v453, %v671
  %v706 = vsub.f32 %v456, %v671
  %v707 = vsub.f32 %v458, %v671
  %v708 = vsub.f32 %v461, %v671
  %v709 = vsub.f32 %v463, %v671
  %v710 = vsub.f32 %v466, %v671
  %v711 = vsub.f32 %v468, %v671
  %v712 = vsub.f32 %v471, %v671
  %v713 = vsub.f32 %v473, %v671
  %v714 = vsub.f32 %v476, %v671
  %v715 = vsub.f32 %v478, %v671
  %v716 = vsub.f32 %v481, %v671
  %v717 = vsub.f32 %v483, %v671
  %v718 = vsub.f32 %v486, %v671
  %v719 = vsub.f32 %v488, %v671
  %v720 = vsub.f32 %v491, %v671
  %v721 = vsub.f32 %v493, %v671
  %v722 = vsub.f32 %v496, %v671
  %v723 = vsub.f32 %v498, %v671
  %v724 = vsub.f32 %v501, %v671
  %v725 = vsub.f32 %v503, %v671
  %v726 = vsub.f32 %v506, %v671
  %v727 = vsub.f32 %v508, %v671
  %v728 = vsub.f32 %v511, %v671
  %v729 = vsub.f32 %v513, %v671
  %v730 = vsub.f32 %v516, %v671
  %v731 = vsub.f32 %v518, %v671
  %v732 = vsub.f32 %v521, %v671
  %v733 = vsub.f32 %v523, %v671
  %v734 = vsub.f32 %v526, %v671
  %v735 = vsub.f32 %v528, %v671
  %v736 = vmul.f32 %v672, %v672
  %v737 = vmul.f32 %v673, %v673
  %v738 = vmul.f32 %v674, %v674
  %v739 = vmul.f32 %v675, %v675
  %v740 = vmul.f32 %v676, %v676
  %v741 = vmul.f32 %v677, %v677
  %v742 = vmul.f32 %v678, %v678
  %v743 = vmul.f32 %v679, %v679
  %v744 = vmul.f32 %v680, %v680
  %v745 = vmul.f32 %v681, %v681
  %v746 = vmul.f32 %v682, %v682
  %v747 = vmul.f32 %v683, %v683
  %v748 = vmul.f32 %v684, %v684
  %v749 = vmul.f32 %v685, %v685
  %v750 = vmul.f32 %v686, %v686
  %v751 = vmul.f32 %v687, %v687
  %v752 = vmul.f32 %v688, %v688
  %v753 = vmul.f32 %v689, %v689
  %v754 = vmul.f32 %v690, %v690
  %v755 = vmul.f32 %v691, %v691
  %v756 = vmul.f32 %v692, %v692
  %v757 = vmul.f32 %v693, %v693
  %v758 = vmul.f32 %v694, %v694
  %v759 = vmul.f32 %v695, %v695
  %v760 = vmul.f32 %v696, %v696
  %v761 = vmul.f32 %v697, %v697
  %v762 = vmul.f32 %v698, %v698
  %v763 = vmul.f32 %v699, %v699
  %v764 = vmul.f32 %v700, %v700
  %v765 = vmul.f32 %v701, %v701
  %v766 = vmul.f32 %v702, %v702
  %v767 = vmul.f32 %v703, %v703
  %v768 = vmul.f32 %v704, %v704
  %v769 = vmul.f32 %v705, %v705
  %v770 = vmul.f32 %v706, %v706
  %v771 = vmul.f32 %v707, %v707
  %v772 = vmul.f32 %v708, %v708
  %v773 = vmul.f32 %v709, %v709
  %v774 = vmul.f32 %v710, %v710
  %v775 = vmul.f32 %v711, %v711
  %v776 = vmul.f32 %v712, %v712
  %v777 = vmul.f32 %v713, %v713
  %v778 = vmul.f32 %v714, %v714
  %v779 = vmul.f32 %v715, %v715
  %v780 = vmul.f32 %v716, %v716
  %v781 = vmul.f32 %v717, %v717
  %v782 = vmul.f32 %v718, %v718
  %v783 = vmul.f32 %v719, %v719
  %v784 = vmul.f32 %v720, %v720
  %v785 = vmul.f32 %v721, %v721
  %v786 = vmul.f32 %v722, %v722
  %v787 = vmul.f32 %v723, %v723
  %v788 = vmul.f32 %v724, %v724
  %v789 = vmul.f32 %v725, %v725
  %v790 = vmul.f32 %v726, %v726
  %v791 = vmul.f32 %v727, %v727
  %v792 = vmul.f32 %v728, %v728
  %v793 = vmul.f32 %v729, %v729
  %v794 = vmul.f32 %v730, %v730
  %v795 = vmul.f32 %v731, %v731
  %v796 = vmul.f32 %v732, %v732
  %v797 = vmul.f32 %v733, %v733
  %v798 = vmul.f32 %v734, %v734
  %v799 = vmul.f32 %v735, %v735
  %v800 = vsel %vm530, %v736, 0.0
  %v801 = vsel %vm530, %v737, 0.0
  %v802 = vadd.f32 %v800, %v801
  %v803 = vsel %vm530, %v738, 0.0
  %v804 = vadd.f32 %v802, %v803
  %v805 = vsel %vm530, %v739, 0.0
  %v806 = vadd.f32 %v804, %v805
  %v807 = vsel %vm530, %v740, 0.0
  %v808 = vadd.f32 %v806, %v807
  %v809 = vsel %vm530, %v741, 0.0
  %v810 = vadd.f32 %v808, %v809
  %v811 = vsel %vm530, %v742, 0.0
  %v812 = vadd.f32 %v810, %v811
  %v813 = vsel %vm530, %v743, 0.0
  %v814 = vadd.f32 %v812, %v813
  %v815 = vsel %vm530, %v744, 0.0
  %v816 = vadd.f32 %v814, %v815
  %v817 = vsel %vm530, %v745, 0.0
  %v818 = vadd.f32 %v816, %v817
  %v819 = vsel %vm530, %v746, 0.0
  %v820 = vadd.f32 %v818, %v819
  %v821 = vsel %vm530, %v747, 0.0
  %v822 = vadd.f32 %v820, %v821
  %v823 = vsel %vm530, %v748, 0.0
  %v824 = vadd.f32 %v822, %v823
  %v825 = vsel %vm530, %v749, 0.0
  %v826 = vadd.f32 %v824, %v825
  %v827 = vsel %vm530, %v750, 0.0
  %v828 = vadd.f32 %v826, %v827
  %v829 = vsel %vm530, %v751, 0.0
  %v830 = vadd.f32 %v828, %v829
  %v831 = vsel %vm530, %v752, 0.0
  %v832 = vadd.f32 %v830, %v831
  %v833 = vsel %vm530, %v753, 0.0
  %v834 = vadd.f32 %v832, %v833
  %v835 = vsel %vm530, %v754, 0.0
  %v836 = vadd.f32 %v834, %v835
  %v837 = vsel %vm530, %v755, 0.0
  %v838 = vadd.f32 %v836, %v837
  %v839 = vsel %vm530, %v756, 0.0
  %v840 = vadd.f32 %v838, %v839
  %v841 = vsel %vm530, %v757, 0.0
  %v842 = vadd.f32 %v840, %v841
  %v843 = vsel %vm530, %v758, 0.0
  %v844 = vadd.f32 %v842, %v843
  %v845 = vsel %vm530, %v759, 0.0
  %v846 = vadd.f32 %v844, %v845
  %v847 = vsel %vm530, %v760, 0.0
  %v848 = vadd.f32 %v846, %v847
  %v849 = vsel %vm530, %v761, 0.0
  %v850 = vadd.f32 %v848, %v849
  %v851 = vsel %vm530, %v762, 0.0
  %v852 = vadd.f32 %v850, %v851
  %v853 = vsel %vm530, %v763, 0.0
  %v854 = vadd.f32 %v852, %v853
  %v855 = vsel %vm530, %v764, 0.0
  %v856 = vadd.f32 %v854, %v855
  %v857 = vsel %vm530, %v765, 0.0
  %v858 = vadd.f32 %v856, %v857
  %v859 = vsel %vm530, %v766, 0.0
  %v860 = vadd.f32 %v858, %v859
  %v861 = vsel %vm530, %v767, 0.0
  %v862 = vadd.f32 %v860, %v861
  %v863 = vsel %vm530, %v768, 0.0
  %v864 = vadd.f32 %v862, %v863
  %v865 = vsel %vm530, %v769, 0.0
  %v866 = vadd.f32 %v864, %v865
  %v867 = vsel %vm530, %v770, 0.0
  %v868 = vadd.f32 %v866, %v867
  %v869 = vsel %vm530, %v771, 0.0
  %v870 = vadd.f32 %v868, %v869
  %v871 = vsel %vm530, %v772, 0.0
  %v872 = vadd.f32 %v870, %v871
  %v873 = vsel %vm530, %v773, 0.0
  %v874 = vadd.f32 %v872, %v873
  %v875 = vsel %vm530, %v774, 0.0
  %v876 = vadd.f32 %v874, %v875
  %v877 = vsel %vm530, %v775, 0.0
  %v878 = vadd.f32 %v876, %v877
  %v879 = vsel %vm530, %v776, 0.0
  %v880 = vadd.f32 %v878, %v879
  %v881 = vsel %vm530, %v777, 0.0
  %v882 = vadd.f32 %v880, %v881
  %v883 = vsel %vm530, %v778, 0.0
  %v884 = vadd.f32 %v882, %v883
  %v885 = vsel %vm530, %v779, 0.0
  %v886 = vadd.f32 %v884, %v885
  %v887 = vsel %vm530, %v780, 0.0
  %v888 = vadd.f32 %v886, %v887
  %v889 = vsel %vm530, %v781, 0.0
  %v890 = vadd.f32 %v888, %v889
  %v891 = vsel %vm530, %v782, 0.0
  %v892 = vadd.f32 %v890, %v891
  %v893 = vsel %vm530, %v783, 0.0
  %v894 = vadd.f32 %v892, %v893
  %v895 = vsel %vm530, %v784, 0.0
  %v896 = vadd.f32 %v894, %v895
  %v897 = vsel %vm530, %v785, 0.0
  %v898 = vadd.f32 %v896, %v897
  %v899 = vsel %vm530, %v786, 0.0
  %v900 = vadd.f32 %v898, %v899
  %v901 = vsel %vm530, %v787, 0.0
  %v902 = vadd.f32 %v900, %v901
  %v903 = vsel %vm530, %v788, 0.0
  %v904 = vadd.f32 %v902, %v903
  %v905 = vsel %vm530, %v789, 0.0
  %v906 = vadd.f32 %v904, %v905
  %v907 = vsel %vm530, %v790, 0.0
  %v908 = vadd.f32 %v906, %v907
  %v909 = vsel %vm530, %v791, 0.0
  %v910 = vadd.f32 %v908, %v909
  %v911 = vsel %vm530, %v792, 0.0
  %v912 = vadd.f32 %v910, %v911
  %v913 = vsel %vm530, %v793, 0.0
  %v914 = vadd.f32 %v912, %v913
  %v915 = vsel %vm530, %v794, 0.0
  %v916 = vadd.f32 %v914, %v915
  %v917 = vsel %vm530, %v795, 0.0
  %v918 = vadd.f32 %v916, %v917
  %v919 = vsel %vm530, %v796, 0.0
  %v920 = vadd.f32 %v918, %v919
  %v921 = vsel %vm530, %v797, 0.0
  %v922 = vadd.f32 %v920, %v921
  %v923 = vsel %vm530, %v798, 0.0
  %v924 = vadd.f32 %v922, %v923
  %v925 = vsel %vm530, %v799, 0.0
  %v926 = vadd.f32 %v924, %v925
  %v927 = vrot.slane %v926, 4
  %v928 = vadd.f32 %v926, %v927
  %v929 = vrot.slane %v928, 2
  %v930 = vadd.f32 %v928, %v929
  %v931 = vrot.slane %v930, 1
  %v932 = vadd.f32 %v930, %v931
  %v933 = vmul.f32 %v932, %v670
  %v934 = vadd.f32 %v933, 1e-05
  %v935 = vrsqrt.pop %v934
  %v936 = vmul.f32 %v935, %v934
  %v937 = vmul.f32 %v936, %v935
  %v938 = vmul.f32 0.5, %v937
  %v939 = vsub.f32 1.5, %v938
  %v940 = vmul.f32 %v935, %v939
  %vm941 = vweird.f32 %v934
  %vm942 = vweird.f32 %v935
  %vm943 = vmor %vm941, %vm942
  %v944 = vsel %vm943, %v935, %v940
  %v945 = vmul.f32 %v672, %v944
  %v946 = vmul.f32 %v673, %v944
  %v947 = vmul.f32 %v674, %v944
  %v948 = vmul.f32 %v675, %v944
  %v949 = vmul.f32 %v676, %v944
  %v950 = vmul.f32 %v677, %v944
  %v951 = vmul.f32 %v678, %v944
  %v952 = vmul.f32 %v679, %v944
  %v953 = vmul.f32 %v680, %v944
  %v954 = vmul.f32 %v681, %v944
  %v955 = vmul.f32 %v682, %v944
  %v956 = vmul.f32 %v683, %v944
  %v957 = vmul.f32 %v684, %v944
  %v958 = vmul.f32 %v685, %v944
  %v959 = vmul.f32 %v686, %v944
  %v960 = vmul.f32 %v687, %v944
  %v961 = vmul.f32 %v688, %v944
  %v962 = vmul.f32 %v689, %v944
  %v963 = vmul.f32 %v690, %v944
  %v964 = vmul.f32 %v691, %v944
  %v965 = vmul.f32 %v692, %v944
  %v966 = vmul.f32 %v693, %v944
  %v967 = vmul.f32 %v694, %v944
  %v968 = vmul.f32 %v695, %v944
  %v969 = vmul.f32 %v696, %v944
  %v970 = vmul.f32 %v697, %v944
  %v971 = vmul.f32 %v698, %v944
  %v972 = vmul.f32 %v699, %v944
  %v973 = vmul.f32 %v700, %v944
  %v974 = vmul.f32 %v701, %v944
  %v975 = vmul.f32 %v702, %v944
  %v976 = vmul.f32 %v703, %v944
  %v977 = vmul.f32 %v704, %v944
  %v978 = vmul.f32 %v705, %v944
  %v979 = vmul.f32 %v706, %v944
  %v980 = vmul.f32 %v707, %v944
  %v981 = vmul.f32 %v708, %v944
  %v982 = vmul.f32 %v709, %v944
  %v983 = vmul.f32 %v710, %v944
  %v984 = vmul.f32 %v711, %v944
  %v985 = vmul.f32 %v712, %v944
  %v986 = vmul.f32 %v713, %v944
  %v987 = vmul.f32 %v714, %v944
  %v988 = vmul.f32 %v715, %v944
  %v989 = vmul.f32 %v716, %v944
  %v990 = vmul.f32 %v717, %v944
  %v991 = vmul.f32 %v718, %v944
  %v992 = vmul.f32 %v719, %v944
  %v993 = vmul.f32 %v720, %v944
  %v994 = vmul.f32 %v721, %v944
  %v995 = vmul.f32 %v722, %v944
  %v996 = vmul.f32 %v723, %v944
  %v997 = vmul.f32 %v724, %v944
  %v998 = vmul.f32 %v725, %v944
  %v999 = vmul.f32 %v726, %v944
  %v1000 = vmul.f32 %v727, %v944
  %v1001 = vmul.f32 %v728, %v944
  %v1002 = vmul.f32 %v729, %v944
  %v1003 = vmul.f32 %v730, %v944
  %v1004 = vmul.f32 %v731, %v944
  %v1005 = vmul.f32 %v732, %v944
  %v1006 = vmul.f32 %v733, %v944
  %v1007 = vmul.f32 %v734, %v944
  %v1008 = vmul.f32 %v735, %v944
  %v1009 = vld [vmem:[%s2] sm:$0x1]
  %v1011 = vperm.slane %v1009, 0
  %v1013 = vmul.f32 %v945, %v1011
  %v1014 = vmul.f32 %v946, %v1011
  %v1015 = vmul.f32 %v947, %v1011
  %v1016 = vmul.f32 %v948, %v1011
  %v1017 = vmul.f32 %v949, %v1011
  %v1018 = vmul.f32 %v950, %v1011
  %v1019 = vmul.f32 %v951, %v1011
  %v1020 = vmul.f32 %v952, %v1011
  %v1021 = vmul.f32 %v953, %v1011
  %v1022 = vmul.f32 %v954, %v1011
  %v1023 = vmul.f32 %v955, %v1011
  %v1024 = vmul.f32 %v956, %v1011
  %v1025 = vmul.f32 %v957, %v1011
  %v1026 = vmul.f32 %v958, %v1011
  %v1027 = vmul.f32 %v959, %v1011
  %v1028 = vmul.f32 %v960, %v1011
  %v1029 = vmul.f32 %v961, %v1011
  %v1030 = vmul.f32 %v962, %v1011
  %v1031 = vmul.f32 %v963, %v1011
  %v1032 = vmul.f32 %v964, %v1011
  %v1033 = vmul.f32 %v965, %v1011
  %v1034 = vmul.f32 %v966, %v1011
  %v1035 = vmul.f32 %v967, %v1011
  %v1036 = vmul.f32 %v968, %v1011
  %v1037 = vmul.f32 %v969, %v1011
  %v1038 = vmul.f32 %v970, %v1011
  %v1039 = vmul.f32 %v971, %v1011
  %v1040 = vmul.f32 %v972, %v1011
  %v1041 = vmul.f32 %v973, %v1011
  %v1042 = vmul.f32 %v974, %v1011
  %v1043 = vmul.f32 %v975, %v1011
  %v1044 = vmul.f32 %v976, %v1011
  %v1045 = vmul.f32 %v977, %v1011
  %v1046 = vmul.f32 %v978, %v1011
  %v1047 = vmul.f32 %v979, %v1011
  %v1048 = vmul.f32 %v980, %v1011
  %v1049 = vmul.f32 %v981, %v1011
  %v1050 = vmul.f32 %v982, %v1011
  %v1051 = vmul.f32 %v983, %v1011
  %v1052 = vmul.f32 %v984, %v1011
  %v1053 = vmul.f32 %v985, %v1011
  %v1054 = vmul.f32 %v986, %v1011
  %v1055 = vmul.f32 %v987, %v1011
  %v1056 = vmul.f32 %v988, %v1011
  %v1057 = vmul.f32 %v989, %v1011
  %v1058 = vmul.f32 %v990, %v1011
  %v1059 = vmul.f32 %v991, %v1011
  %v1060 = vmul.f32 %v992, %v1011
  %v1061 = vmul.f32 %v993, %v1011
  %v1062 = vmul.f32 %v994, %v1011
  %v1063 = vmul.f32 %v995, %v1011
  %v1064 = vmul.f32 %v996, %v1011
  %v1065 = vmul.f32 %v997, %v1011
  %v1066 = vmul.f32 %v998, %v1011
  %v1067 = vmul.f32 %v999, %v1011
  %v1068 = vmul.f32 %v1000, %v1011
  %v1069 = vmul.f32 %v1001, %v1011
  %v1070 = vmul.f32 %v1002, %v1011
  %v1071 = vmul.f32 %v1003, %v1011
  %v1072 = vmul.f32 %v1004, %v1011
  %v1073 = vmul.f32 %v1005, %v1011
  %v1074 = vmul.f32 %v1006, %v1011
  %v1075 = vmul.f32 %v1007, %v1011
  %v1076 = vmul.f32 %v1008, %v1011
  %v1077 = vld [vmem:[%s3] sm:$0x1]
  %v1079 = vperm.slane %v1077, 0
  %v1081 = vadd.f32 %v1013, %v1079
  %v1082 = vadd.f32 %v1014, %v1079
  %v1083 = vadd.f32 %v1015, %v1079
  %v1084 = vadd.f32 %v1016, %v1079
  %v1085 = vadd.f32 %v1017, %v1079
  %v1086 = vadd.f32 %v1018, %v1079
  %v1087 = vadd.f32 %v1019, %v1079
  %v1088 = vadd.f32 %v1020, %v1079
  %v1089 = vadd.f32 %v1021, %v1079
  %v1090 = vadd.f32 %v1022, %v1079
  %v1091 = vadd.f32 %v1023, %v1079
  %v1092 = vadd.f32 %v1024, %v1079
  %v1093 = vadd.f32 %v1025, %v1079
  %v1094 = vadd.f32 %v1026, %v1079
  %v1095 = vadd.f32 %v1027, %v1079
  %v1096 = vadd.f32 %v1028, %v1079
  %v1097 = vadd.f32 %v1029, %v1079
  %v1098 = vadd.f32 %v1030, %v1079
  %v1099 = vadd.f32 %v1031, %v1079
  %v1100 = vadd.f32 %v1032, %v1079
  %v1101 = vadd.f32 %v1033, %v1079
  %v1102 = vadd.f32 %v1034, %v1079
  %v1103 = vadd.f32 %v1035, %v1079
  %v1104 = vadd.f32 %v1036, %v1079
  %v1105 = vadd.f32 %v1037, %v1079
  %v1106 = vadd.f32 %v1038, %v1079
  %v1107 = vadd.f32 %v1039, %v1079
  %v1108 = vadd.f32 %v1040, %v1079
  %v1109 = vadd.f32 %v1041, %v1079
  %v1110 = vadd.f32 %v1042, %v1079
  %v1111 = vadd.f32 %v1043, %v1079
  %v1112 = vadd.f32 %v1044, %v1079
  %v1113 = vadd.f32 %v1045, %v1079
  %v1114 = vadd.f32 %v1046, %v1079
  %v1115 = vadd.f32 %v1047, %v1079
  %v1116 = vadd.f32 %v1048, %v1079
  %v1117 = vadd.f32 %v1049, %v1079
  %v1118 = vadd.f32 %v1050, %v1079
  %v1119 = vadd.f32 %v1051, %v1079
  %v1120 = vadd.f32 %v1052, %v1079
  %v1121 = vadd.f32 %v1053, %v1079
  %v1122 = vadd.f32 %v1054, %v1079
  %v1123 = vadd.f32 %v1055, %v1079
  %v1124 = vadd.f32 %v1056, %v1079
  %v1125 = vadd.f32 %v1057, %v1079
  %v1126 = vadd.f32 %v1058, %v1079
  %v1127 = vadd.f32 %v1059, %v1079
  %v1128 = vadd.f32 %v1060, %v1079
  %v1129 = vadd.f32 %v1061, %v1079
  %v1130 = vadd.f32 %v1062, %v1079
  %v1131 = vadd.f32 %v1063, %v1079
  %v1132 = vadd.f32 %v1064, %v1079
  %v1133 = vadd.f32 %v1065, %v1079
  %v1134 = vadd.f32 %v1066, %v1079
  %v1135 = vadd.f32 %v1067, %v1079
  %v1136 = vadd.f32 %v1068, %v1079
  %v1137 = vadd.f32 %v1069, %v1079
  %v1138 = vadd.f32 %v1070, %v1079
  %v1139 = vadd.f32 %v1071, %v1079
  %v1140 = vadd.f32 %v1072, %v1079
  %v1141 = vadd.f32 %v1073, %v1079
  %v1142 = vadd.f32 %v1074, %v1079
  %v1143 = vadd.f32 %v1075, %v1079
  %v1144 = vadd.f32 %v1076, %v1079
  %1145 = vst.msk [vmem:[%s4] sm:$0xff] %vm530, %v1081
  %1146 = vst.msk [vmem:[%s4 + $0x8] sm:$0xff] %vm530, %v1082
  %1147 = vst.msk [vmem:[%s4 + $0x10] sm:$0xff] %vm530, %v1083
  %1148 = vst.msk [vmem:[%s4 + $0x18] sm:$0xff] %vm530, %v1084
  %1149 = vst.msk [vmem:[%s4 + $0x20] sm:$0xff] %vm530, %v1085
  %1150 = vst.msk [vmem:[%s4 + $0x28] sm:$0xff] %vm530, %v1086
  %1151 = vst.msk [vmem:[%s4 + $0x30] sm:$0xff] %vm530, %v1087
  %1152 = vst.msk [vmem:[%s4 + $0x38] sm:$0xff] %vm530, %v1088
  %1153 = vst.msk [vmem:[%s4 + $0x40] sm:$0xff] %vm530, %v1089
  %1154 = vst.msk [vmem:[%s4 + $0x48] sm:$0xff] %vm530, %v1090
  %1155 = vst.msk [vmem:[%s4 + $0x50] sm:$0xff] %vm530, %v1091
  %1156 = vst.msk [vmem:[%s4 + $0x58] sm:$0xff] %vm530, %v1092
  %1157 = vst.msk [vmem:[%s4 + $0x60] sm:$0xff] %vm530, %v1093
  %1158 = vst.msk [vmem:[%s4 + $0x68] sm:$0xff] %vm530, %v1094
  %1159 = vst.msk [vmem:[%s4 + $0x70] sm:$0xff] %vm530, %v1095
  %1160 = vst.msk [vmem:[%s4 + $0x78] sm:$0xff] %vm530, %v1096
  %1161 = vst.msk [vmem:[%s4 + $0x80] sm:$0xff] %vm530, %v1097
  %1162 = vst.msk [vmem:[%s4 + $0x88] sm:$0xff] %vm530, %v1098
  %1163 = vst.msk [vmem:[%s4 + $0x90] sm:$0xff] %vm530, %v1099
  %1164 = vst.msk [vmem:[%s4 + $0x98] sm:$0xff] %vm530, %v1100
  %1165 = vst.msk [vmem:[%s4 + $0xa0] sm:$0xff] %vm530, %v1101
  %1166 = vst.msk [vmem:[%s4 + $0xa8] sm:$0xff] %vm530, %v1102
  %1167 = vst.msk [vmem:[%s4 + $0xb0] sm:$0xff] %vm530, %v1103
  %1168 = vst.msk [vmem:[%s4 + $0xb8] sm:$0xff] %vm530, %v1104
  %1169 = vst.msk [vmem:[%s4 + $0xc0] sm:$0xff] %vm530, %v1105
  %1170 = vst.msk [vmem:[%s4 + $0xc8] sm:$0xff] %vm530, %v1106
  %1171 = vst.msk [vmem:[%s4 + $0xd0] sm:$0xff] %vm530, %v1107
  %1172 = vst.msk [vmem:[%s4 + $0xd8] sm:$0xff] %vm530, %v1108
  %1173 = vst.msk [vmem:[%s4 + $0xe0] sm:$0xff] %vm530, %v1109
  %1174 = vst.msk [vmem:[%s4 + $0xe8] sm:$0xff] %vm530, %v1110
  %1175 = vst.msk [vmem:[%s4 + $0xf0] sm:$0xff] %vm530, %v1111
  %1176 = vst.msk [vmem:[%s4 + $0xf8] sm:$0xff] %vm530, %v1112
  %1177 = vst.msk [vmem:[%s4 + $0x100] sm:$0xff] %vm530, %v1113
  %1178 = vst.msk [vmem:[%s4 + $0x108] sm:$0xff] %vm530, %v1114
  %1179 = vst.msk [vmem:[%s4 + $0x110] sm:$0xff] %vm530, %v1115
  %1180 = vst.msk [vmem:[%s4 + $0x118] sm:$0xff] %vm530, %v1116
  %1181 = vst.msk [vmem:[%s4 + $0x120] sm:$0xff] %vm530, %v1117
  %1182 = vst.msk [vmem:[%s4 + $0x128] sm:$0xff] %vm530, %v1118
  %1183 = vst.msk [vmem:[%s4 + $0x130] sm:$0xff] %vm530, %v1119
  %1184 = vst.msk [vmem:[%s4 + $0x138] sm:$0xff] %vm530, %v1120
  %1185 = vst.msk [vmem:[%s4 + $0x140] sm:$0xff] %vm530, %v1121
  %1186 = vst.msk [vmem:[%s4 + $0x148] sm:$0xff] %vm530, %v1122
  %1187 = vst.msk [vmem:[%s4 + $0x150] sm:$0xff] %vm530, %v1123
  %1188 = vst.msk [vmem:[%s4 + $0x158] sm:$0xff] %vm530, %v1124
  %1189 = vst.msk [vmem:[%s4 + $0x160] sm:$0xff] %vm530, %v1125
  %1190 = vst.msk [vmem:[%s4 + $0x168] sm:$0xff] %vm530, %v1126
  %1191 = vst.msk [vmem:[%s4 + $0x170] sm:$0xff] %vm530, %v1127
  %1192 = vst.msk [vmem:[%s4 + $0x178] sm:$0xff] %vm530, %v1128
  %1193 = vst.msk [vmem:[%s4 + $0x180] sm:$0xff] %vm530, %v1129
  %1194 = vst.msk [vmem:[%s4 + $0x188] sm:$0xff] %vm530, %v1130
  %1195 = vst.msk [vmem:[%s4 + $0x190] sm:$0xff] %vm530, %v1131
  %1196 = vst.msk [vmem:[%s4 + $0x198] sm:$0xff] %vm530, %v1132
  %1197 = vst.msk [vmem:[%s4 + $0x1a0] sm:$0xff] %vm530, %v1133
  %1198 = vst.msk [vmem:[%s4 + $0x1a8] sm:$0xff] %vm530, %v1134
  %1199 = vst.msk [vmem:[%s4 + $0x1b0] sm:$0xff] %vm530, %v1135
  %1200 = vst.msk [vmem:[%s4 + $0x1b8] sm:$0xff] %vm530, %v1136
  %1201 = vst.msk [vmem:[%s4 + $0x1c0] sm:$0xff] %vm530, %v1137
  %1202 = vst.msk [vmem:[%s4 + $0x1c8] sm:$0xff] %vm530, %v1138
  %1203 = vst.msk [vmem:[%s4 + $0x1d0] sm:$0xff] %vm530, %v1139
  %1204 = vst.msk [vmem:[%s4 + $0x1d8] sm:$0xff] %vm530, %v1140
  %1205 = vst.msk [vmem:[%s4 + $0x1e0] sm:$0xff] %vm530, %v1141
  %1206 = vst.msk [vmem:[%s4 + $0x1e8] sm:$0xff] %vm530, %v1142
  %1207 = vst.msk [vmem:[%s4 + $0x1f0] sm:$0xff] %vm530, %v1143
  %1208 = vst.msk [vmem:[%s4 + $0x1f8] sm:$0xff] %vm530, %v1144
  // Predicated region
  $region18: #{fused_matmul.1} parent=0 // pred_check
    _
  $region19: #{fused_matmul.1} parent=0 // pred_check_branch
    %1210 = sbr.rel (0) target = $region21
  $region20: #{fused_matmul.1} parent=0 // pred_region
    _
  $region21: #{fused_matmul.1} parent=0 // pred_fallthru
    _
  // Predicated region
  $region22: #{fused_matmul.1} parent=0 // pred_check
    _
  $region23: #{fused_matmul.1} parent=0 // pred_check_branch
    %1212 = sbr.rel (0) target = $region25
  $region24: #{fused_matmul.1} parent=0 // pred_region
    _
  $region25: #{fused_matmul.1} parent=0 // pred_fallthru
    _

</llo_original>
